<compile_context>
chip_gen: v5e
topology: v5e:2x2
jax: 0.10.0
libtpu: 0.0.40
codegen_flags: <defaults>
</compile_context>

<pallas_src>
import functools

import jax
import jax.numpy as jnp
from jax.experimental import pallas as pl
from jax.experimental.pallas import tpu as pltpu


# ------------------------------ kernel ----------------------------------- #
def _adain_kernel(x_ref, wb_ref, o_ref, *, eps, row_tile, bf16_epilogue):
    """One block of rows; each row is one (b, c) instance flattened to H*W.

    x_ref:  (row_tile, H*W)  activations (input dtype)
    wb_ref: (BC_pad, 2)      packed [gamma, beta] in f32, VMEM-resident
    o_ref:  (row_tile, H*W)  output
    """
    i = pl.program_id(0)
    r0 = pl.multiple_of(i * row_tile, row_tile)
    wb = wb_ref[pl.ds(r0, row_tile), :]                 # (row_tile, 2) f32
    gamma = wb[:, 0:1]                                  # (row_tile, 1)
    beta = wb[:, 1:2]                                   # (row_tile, 1)

    x_nat = x_ref[...]                                  # native dtype
    x = x_nat.astype(jnp.float32)                       # f32 for stats

    # Two-pass biased variance in f32 (avoids E[x^2]-E[x]^2 cancellation).
    # The centered temporary `d` is only live for the stats, not the epilogue.
    mean = jnp.mean(x, axis=-1, keepdims=True)          # (row_tile, 1), XLU
    d = x - mean
    var = jnp.mean(d * d, axis=-1, keepdims=True)       # (row_tile, 1)

    # Per-row affine: y = x * scale + shift  (one mul + add per element).
    scale = gamma * jax.lax.rsqrt(var + eps)            # EUP rsqrt
    shift = beta - mean * scale

    if bf16_epilogue:
        # bf16 VPU epilogue (v6e/v7x); stats stayed in f32 above.  Harmless
        # (re-widened) on v5e.
        y = x_nat * scale.astype(jnp.bfloat16) + shift.astype(jnp.bfloat16)
    else:
        y = x * scale + shift
    o_ref[...] = y.astype(o_ref.dtype)


# --------------------------- tiling helpers ------------------------------ #
def _vmem_budget_and_limit():
    """Generation-aware VMEM budget for the block working set plus the scoped
    VMEM limit handed to the compiler (v5e default scoped limit is only
    16 MiB; v6e/v7x 32 MiB; physical 128/128/64 MiB)."""
    try:
        cap = int(pltpu.get_tpu_info().vmem_capacity_bytes)
    except Exception:  # pragma: no cover - conservative fallback (v7x-sized)
        cap = 64 * 1024 * 1024
    budget = min(cap // 4, 24 * 1024 * 1024)   # ~24 MiB v5e/v6e, ~16 MiB v7x
    limit = min(cap // 2, 32 * 1024 * 1024)    # explicit scoped-VMEM limit
    return budget, limit


def _pick_row_tile(n_rows, hw, itemsize, budget_bytes):
    """Largest legal row block that fits the budget, capped so the grid has
    at least 2 steps when n_rows >= 16 (v7x megacore; no-op on v5e/v6e)."""
    # Per-row bytes: in + out tiles with up-to-3-deep buffering, plus the f32
    # working set inside the body (upcast x, centered d, one more transient).
    n_io_buffers = 3
    per_row = hw * (itemsize * 2 * n_io_buffers + 4 * 3)
    cap = (budget_bytes // per_row) // 8 * 8
    if cap < 8:
        # TODO(synk): spatially-tiled two-pass variant (grid over (rows, HW)
        # with an "arbitrary" spatial axis accumulating per-row stats) for
        # extremely large H*W instead of raising.
        raise NotImplementedError(
            "H*W too large for a single (8, H*W) block in VMEM; a spatially "
            f"tiled variant is required (H*W={hw}, per-row bytes={per_row}, "
            f"budget={budget_bytes}).")
    if n_rows <= 16:
        target = n_rows                       # tiny: one full-axis block
    else:
        target = (pl.cdiv(n_rows, 2) + 7) // 8 * 8   # >=2 grid steps
    return min(cap, target)


# ------------------------------ wrapper ----------------------------------- #
def adaptive_instance_norm_2d(x, weight, bias, eps=1e-5, row_tile=None):
    """x: (B, C, H, W) NCHW.  weight, bias: (B*C,) AdaIN-assigned gamma/beta
    (as set by assign_adain_params).  Returns (B, C, H, W)."""
    B, C, H, W = x.shape
    BC, HW = B * C, H * W

    # Contiguous lane-dense view; no transposes, no HBM copies.
    # NOTE: if H*W is not a multiple of 128 (e.g. 7x7 / 14x14 maps) the last
    # lane vreg is masked and stores become vst.msk; padding HW (or folding C
    # into the lane axis) would help in that regime.  Power-of-two spatial
    # sizes are unaffected.
    x2 = x.reshape(BC, HW)

    budget, vmem_limit = _vmem_budget_and_limit()
    if row_tile is None:
        row_tile = _pick_row_tile(BC, HW, x.dtype.itemsize, budget)
    else:
        assert row_tile == BC or row_tile % 8 == 0, "row_tile must be BC or a multiple of 8"
    n_blocks = pl.cdiv(BC, row_tile)
    bc_pad = n_blocks * row_tile

    # gamma/beta packed into one tiny f32 (bc_pad, 2) array that stays
    # VMEM-resident across the whole grid (constant index_map) -> no per-step
    # parameter DMAs.  Padding keeps the in-kernel row slice in bounds on the
    # (masked) edge block.
    wb = jnp.zeros((bc_pad, 2), jnp.float32)
    wb = wb.at[:BC, 0].set(jnp.reshape(weight, (BC,)).astype(jnp.float32))
    wb = wb.at[:BC, 1].set(jnp.reshape(bias, (BC,)).astype(jnp.float32))

    bf16_epilogue = (x.dtype == jnp.bfloat16)
    n_buffers = 3 if n_blocks >= 3 else 2

    cost = pl.CostEstimate(
        flops=5 * BC * HW,
        transcendentals=BC,
        bytes_accessed=2 * BC * HW * x.dtype.itemsize + bc_pad * 2 * 4,
    )

    kernel = functools.partial(_adain_kernel, eps=eps, row_tile=row_tile,
                               bf16_epilogue=bf16_epilogue)

    def _run(num_buffers):
        def io_spec():
            if num_buffers > 2:
                return pl.BlockSpec((row_tile, HW), lambda i: (i, 0),
                                    pipeline_mode=pl.Buffered(num_buffers))
            return pl.BlockSpec((row_tile, HW), lambda i: (i, 0))

        return pl.pallas_call(
            kernel,
            out_shape=jax.ShapeDtypeStruct((BC, HW), x.dtype),
            grid_spec=pltpu.PrefetchScalarGridSpec(
                num_scalar_prefetch=0,
                grid=(n_blocks,),
                in_specs=[
                    io_spec(),                                    # activations
                    pl.BlockSpec((bc_pad, 2), lambda i: (0, 0)),  # gamma/beta
                ],
                out_specs=io_spec(),
            ),
            compiler_params=pltpu.CompilerParams(
                dimension_semantics=("parallel",),
                vmem_limit_bytes=vmem_limit),
            cost_estimate=cost,
        )(x2, wb)

    try:
        out = _run(n_buffers)
    except Exception:
        if n_buffers == 2:
            raise
        out = _run(2)   # fall back to default double-buffering

    return out.reshape(B, C, H, W)


# ------------------------- pure-JAX reference ---------------------------- #
def _ref_adain(x, weight, bias, eps=1e-5):
    B, C, H, W = x.shape
    xr = x.reshape(B * C, H * W).astype(jnp.float32)
    mean = jnp.mean(xr, axis=1, keepdims=True)
    var = jnp.mean((xr - mean) ** 2, axis=1, keepdims=True)
    y = (xr - mean) * jax.lax.rsqrt(var + eps)
    y = y * weight.reshape(-1, 1).astype(jnp.float32) \
        + bias.reshape(-1, 1).astype(jnp.float32)
    return y.reshape(B, C, H, W).astype(x.dtype)


if __name__ == "__main__":
    eps = 1e-5
    key = jax.random.PRNGKey(0)

    def make_case(k, B, C, H, W, dtype):
        kx, kw, kb = jax.random.split(k, 3)
        x = jax.random.normal(kx, (B, C, H, W), jnp.float32).astype(dtype)
        w = 0.5 + jax.random.uniform(kw, (B * C,), jnp.float32, 0.0, 1.0)
        b = jax.random.normal(kb, (B * C,), dtype=jnp.float32)
        return x, w, b

    # (B, C, H, W, dtype, forced_row_tile, atol, rtol)
    cases = [
        (2, 4, 16, 16, jnp.float32, None, 1e-4, 1e-4),  # module-default shape
        (4, 8, 16, 16, jnp.float32, None, 1e-4, 1e-4),  # BC>=16 -> 2 grid steps
        (3, 4, 16, 16, jnp.bfloat16, 8, 8e-2, 2e-2),    # edge block + bf16 epilogue
        (4, 8, 16, 16, jnp.float32, 8, 1e-4, 1e-4),     # 4 blocks -> Buffered(3)
    ]
    for idx, (B, C, H, W, dtype, rt, atol, rtol) in enumerate(cases):
        key, sub = jax.random.split(key)
        x, w, b = make_case(sub, B, C, H, W, dtype)
        out = jax.block_until_ready(
            adaptive_instance_norm_2d(x, w, b, eps=eps, row_tile=rt))
        ref = jax.block_until_ready(_ref_adain(x, w, b, eps=eps))
        assert out.shape == (B, C, H, W), (idx, out.shape)
        ok = jnp.allclose(out.astype(jnp.float32), ref.astype(jnp.float32),
                          atol=atol, rtol=rtol)
        err = float(jnp.max(jnp.abs(out.astype(jnp.float32)
                                    - ref.astype(jnp.float32))))
        assert bool(ok), (idx, err)

    print("KERNEL_OK")
</pallas_src>

<mosaic_0001>
module attributes {stable_mosaic.version = 11 : i64} {
  func.func @_adain_kernel(%arg0: i32, %arg1: memref<8x256xf32, #tpu.memory_space<vmem>>, %arg2: memref<8x2xf32, #tpu.memory_space<vmem>>, %arg3: memref<8x256xf32, #tpu.memory_space<vmem>>) attributes {dimension_semantics = [#tpu.dimension_semantics<parallel>], iteration_bounds = array<i64: 1>, scalar_prefetch = 0 : i64, scratch_operands = 0 : i64, tpu.core_type = #tpu.core_type<tc>, window_params = [{transform_indices = @transform_0, window_bounds = array<i64: 8, 256>}, {pipeline_mode = #tpu.pipeline_mode<synchronous>, transform_indices = @transform_1, window_bounds = array<i64: 8, 2>}, {transform_indices = @transform_2, window_bounds = array<i64: 8, 256>}]} {
    %c8_i32 = arith.constant 8 : i32
    %0 = arith.muli %arg0, %c8_i32 : i32
    %1 = tpu.assume_multiple %0, 8 : i32
    %2 = arith.index_cast %1 : i32 to index
    %c0 = arith.constant 0 : index
    %3 = vector.load %arg2[%2, %c0] : memref<8x2xf32, #tpu.memory_space<vmem>>, vector<8x2xf32>
    %4 = vector.extract_strided_slice %3 {offsets = [0, 0], sizes = [8, 1], strides = [1, 1]} : vector<8x2xf32> to vector<8x1xf32>
    %5 = vector.extract_strided_slice %3 {offsets = [0, 1], sizes = [8, 1], strides = [1, 1]} : vector<8x2xf32> to vector<8x1xf32>
    %c0_0 = arith.constant 0 : index
    %c0_1 = arith.constant 0 : index
    %6 = vector.load %arg1[%c0_0, %c0_1] : memref<8x256xf32, #tpu.memory_space<vmem>>, vector<8x256xf32>
    %cst = arith.constant dense<0.000000e+00> : vector<8xf32>
    %7 = vector.multi_reduction <add>, %6, %cst [1] : vector<8x256xf32> to vector<8xf32>
    %8 = vector.shape_cast %7 : vector<8xf32> to vector<8x1xf32>
    %cst_2 = arith.constant 2.560000e+02 : f32
    %9 = vector.broadcast %cst_2 : f32 to vector<8x1xf32>
    %10 = arith.divf %8, %9 : vector<8x1xf32>
    %11 = vector.broadcast %10 : vector<8x1xf32> to vector<8x256xf32>
    %12 = arith.subf %6, %11 : vector<8x256xf32>
    %13 = arith.mulf %12, %12 : vector<8x256xf32>
    %cst_3 = arith.constant dense<0.000000e+00> : vector<8xf32>
    %14 = vector.multi_reduction <add>, %13, %cst_3 [1] : vector<8x256xf32> to vector<8xf32>
    %15 = vector.shape_cast %14 : vector<8xf32> to vector<8x1xf32>
    %cst_4 = arith.constant 2.560000e+02 : f32
    %16 = vector.broadcast %cst_4 : f32 to vector<8x1xf32>
    %17 = arith.divf %15, %16 : vector<8x1xf32>
    %cst_5 = arith.constant 9.99999974E-6 : f32
    %18 = vector.broadcast %cst_5 : f32 to vector<8x1xf32>
    %19 = arith.addf %17, %18 : vector<8x1xf32>
    %20 = math.rsqrt %19 : vector<8x1xf32>
    %21 = arith.mulf %4, %20 : vector<8x1xf32>
    %22 = arith.mulf %10, %21 : vector<8x1xf32>
    %23 = arith.subf %5, %22 : vector<8x1xf32>
    %24 = vector.broadcast %21 : vector<8x1xf32> to vector<8x256xf32>
    %25 = arith.mulf %6, %24 : vector<8x256xf32>
    %26 = vector.broadcast %23 : vector<8x1xf32> to vector<8x256xf32>
    %27 = arith.addf %25, %26 : vector<8x256xf32>
    %c0_6 = arith.constant 0 : index
    %c0_7 = arith.constant 0 : index
    %28 = vector.load %arg3[%c0_6, %c0_7] : memref<8x256xf32, #tpu.memory_space<vmem>>, vector<8x256xf32>
    tpu.vector_store %arg3[%c0_6, %c0_7], %27 {strides = array<i32>} : memref<8x256xf32, #tpu.memory_space<vmem>>, vector<8x256xf32>,
    return
  }
  func.func @transform_0(%arg0: i32) -> (i32, i32) {
    %c0_i32 = arith.constant 0 : i32
    %c0_i32_0 = arith.constant 0 : i32
    return %arg0, %c0_i32 : i32, i32
  }
  func.func @transform_1(%arg0: i32) -> (i32, i32) {
    %c0_i32 = arith.constant 0 : i32
    %c0_i32_0 = arith.constant 0 : i32
    %c0_i32_1 = arith.constant 0 : i32
    return %c0_i32, %c0_i32_0 : i32, i32
  }
  func.func @transform_2(%arg0: i32) -> (i32, i32) {
    %c0_i32 = arith.constant 0 : i32
    %c0_i32_0 = arith.constant 0 : i32
    return %arg0, %c0_i32 : i32, i32
  }
}

</mosaic_0001>

<llo_original>
// kernel: tpu_custom_call.1
$region0: #{tpu_custom_call.1}
  #allocation0 [shape = 'u32[]', space=smem, size = 0x4, offset = 0x4, fixed_abs, tag = 'smem constant byte address 0x4 - core index']
  #allocation1 [shape = 'u32[72,128]{1,0:T(1,128)}', space=vmem, size = 0x9000, scoped, tag = 'internal scratch']
  %s0 = inlined_call_operand.hbm [shape: f32[8,256], index: 0, kind: input, shape index: {}]
  %s1 = inlined_call_operand.vmem [shape: f32[8,2], index: 1, kind: input, shape index: {}]
  %s2 = inlined_call_operand.hbm [shape: f32[8,256], index: 2, kind: output, shape index: {}]
  %s3 = sld [smem:[#allocation0]]
  $region22: #{tpu_custom_call.1} parent=0
    _
  %s5 = ssub.s32 1, %s3
  %s6 = scalar_select 0, %s5, %s3
  $region1: #{tpu_custom_call.1} parent=0
    #allocation2 [shape = 'u8[8192]{0}', space=vmem, size = 0x2000, scoped, tag = 'input window, operand 0, single buffered']
    #allocation3 [shape = 's32[1]{0}', space=sflag, size = 0x4, scoped, tag = 'scoped memory for tpu_custom_call.1']
    #allocation4 [shape = 's32[1]{0}', space=sflag, size = 0x4, scoped, tag = 'scoped memory for tpu_custom_call.1']
    #allocation5 [shape = 'u8[8192]{0}', space=vmem, size = 0x2000, scoped, tag = 'output window, operand 0, single buffered']
    %7 = vsyncpa [#allocation3], 0
    %8 = vsyncpa [#allocation4], 0
    // Predicated region
    $region2: #{tpu_custom_call.1} parent=1 // pred_check
      _
    $region3: #{tpu_custom_call.1} parent=1 // pred_check_branch
      %10 = sbr.rel (0) target = $region5
    $region4: #{tpu_custom_call.1} parent=1 // pred_region
      %12 = vsyncadd [#allocation3], 0
      %s14 = sshll.u32 %s0, 4
      %s15 = int_to_ptr.hbm [resolvable:$true] %s14
      %s16 = sshll.u32 [#allocation2], 4
      %s17 = int_to_ptr.vmem [resolvable:$true] %s16
      %19 = dma.hbm_to_vmem [thread:$0]  %s15, 256, %s17, [#allocation3]
    $region5: #{tpu_custom_call.1} parent=1 // pred_fallthru
      _
    // Predicated region
    $region6: #{tpu_custom_call.1} parent=1 // pred_check
      _
    $region7: #{tpu_custom_call.1} parent=1 // pred_check_branch
      %21 = sbr.rel (0) target = $region9
    $region8: #{tpu_custom_call.1} parent=1 // pred_region
      _
    $region9: #{tpu_custom_call.1} parent=1 // pred_fallthru
      _
    // Predicated region
    $region10: #{tpu_custom_call.1} parent=1 // pred_check
      _
    $region11: #{tpu_custom_call.1} parent=1 // pred_check_branch
      %23 = sbr.rel (0) target = $region13
    $region12: #{tpu_custom_call.1} parent=1 // pred_region
      %25 = dma.done [#allocation3], 256
    $region13: #{tpu_custom_call.1} parent=1 // pred_fallthru
      _
    %s26 = smul.u32 0, 8
    %s27 = scalar_lea.vmem %s1, %s26
    %v28 = vld [vmem:[%s27] sm:$0xff]
    %v29 = vld [vmem:[#allocation2] sm:$0xff]
    %v30 = vld [vmem:[#allocation2 + $0x8] sm:$0xff]
    %v31 = vadd.f32 %v29, %v30
    %32 = vadd.xlane.f32.xlu0 %v31
    %v33 = vpop.xlane.xlu0 %32
    %v34 = vrcp.pop 256.0
    %v35 = vmul.f32 256.0, %v34
    %v36 = vsub.f32 1.0, %v35
    %v37 = vmul.f32 %v34, %v36
    %v38 = vadd.f32 %v34, %v37
    %vm39 = vweird.f32 %v34
    %v40 = vsel %vm39, %v34, %v38
    %v41 = vmul.f32 %v33, %v40
    %v42 = vsub.f32 %v29, %v41
    %v43 = vsub.f32 %v30, %v41
    %v44 = vmul.f32 %v42, %v42
    %v45 = vmul.f32 %v43, %v43
    %v46 = vadd.f32 %v44, %v45
    %47 = vadd.xlane.f32.xlu0 %v46
    %v48 = vpop.xlane.xlu0 %47
    %v49 = vmul.f32 %v48, %v40
    %v50 = vadd.f32 %v49, 1e-05
    %v51 = vrsqrt.pop %v50
    %v52 = vmul.f32 %v51, %v50
    %v53 = vmul.f32 %v52, %v51
    %v54 = vmul.f32 0.5, %v53
    %v55 = vsub.f32 1.5, %v54
    %v56 = vmul.f32 %v51, %v55
    %vm57 = vweird.f32 %v50
    %vm58 = vweird.f32 %v51
    %vm59 = vmor %vm57, %vm58
    %v60 = vsel %vm59, %v51, %v56
    %v61 = vmul.f32 %v28, %v60
    %v62 = vmul.f32 %v41, %v61
    %64 = vrot.lane.b32.xlu0 %v62, 1
    %v65 = vpop.permute.xlu0 %64
    %v67 = vsub.f32 %v28, %v65
    %69 = vset.pattern.permute.xlu0 0
    %70 = vperm.xlu0 %69, %v61
    %v71 = vpop.permute.xlu0 %70
    %v73 = vmul.f32 %v29, %v71
    %v74 = vmul.f32 %v30, %v71
    %76 = vset.pattern.permute.xlu0 1
    %77 = vperm.xlu0 %76, %v67
    %v78 = vpop.permute.xlu0 %77
    %v80 = vadd.f32 %v73, %v78
    %v81 = vadd.f32 %v74, %v78
    %82 = vst [vmem:[#allocation5] sm:$0xff] %v80
    %83 = vst [vmem:[#allocation5 + $0x8] sm:$0xff] %v81
    // Predicated region
    $region14: #{tpu_custom_call.1} parent=1 // pred_check
      _
    $region15: #{tpu_custom_call.1} parent=1 // pred_check_branch
      %85 = sbr.rel (0) target = $region17
    $region16: #{tpu_custom_call.1} parent=1 // pred_region
      %87 = vsyncadd [#allocation4], 0
      %s89 = sshll.u32 [#allocation5], 4
      %s90 = int_to_ptr.vmem [resolvable:$true] %s89
      %s91 = sshll.u32 %s2, 4
      %s92 = int_to_ptr.hbm [resolvable:$true] %s91
      %94 = dma.vmem_to_hbm [thread:$0]  %s90, 256, %s92, [#allocation4]
    $region17: #{tpu_custom_call.1} parent=1 // pred_fallthru
      _
    // Predicated region
    $region18: #{tpu_custom_call.1} parent=1 // pred_check
      _
    $region19: #{tpu_custom_call.1} parent=1 // pred_check_branch
      %96 = sbr.rel (0) target = $region21
    $region20: #{tpu_custom_call.1} parent=1 // pred_region
      %98 = dma.done [#allocation4], 256
    $region21: #{tpu_custom_call.1} parent=1 // pred_fallthru
      _
    %99 = vsyncpa [#allocation3], 1
    %100 = vsyncpa [#allocation4], 1

</llo_original>
